<compile_context>
chip_gen: v6e
topology: v6e:2x2x1
jax: 0.10.0
libtpu: 0.0.40
codegen_flags: <defaults>
</compile_context>

<pallas_src>
import jax
import jax.numpy as jnp
from jax.experimental import pallas as pl
from jax.experimental.pallas import tpu as pltpu


def _round_up(x, m):
    return (x + m - 1) // m * m


def _embed_gather_kernel(off_ref, table_ref, out_ref):
    """One grid step: gather a tile of packed token embeddings.

    off_ref:   (Tg, P)     int32  -- off[r, p] = token_id(r*P + p) + p*V
    table_ref: (P*V, P*E)  float  -- block-diagonal embedding table (VMEM resident)
    out_ref:   (Tg, P*E)   float  -- lane-dense packed output tile
    """
    tg = off_ref.shape[0]
    p_slots = off_ref.shape[1]
    pv = table_ref.shape[0]

    off = off_ref[...]                                       # (Tg, P)
    # Regenerated each step: single VPU pass, negligible at char-sized V.
    # (Not hoisted into pid==0-gated scratch: unsafe with "parallel" sharding.)
    col = jax.lax.broadcasted_iota(jnp.int32, (tg, pv), 1)   # (Tg, P*V)

    hit = col == off[:, 0:1]
    for p in range(1, p_slots):                              # static loop, P <= 4
        hit = jnp.logical_or(hit, col == off[:, p:p + 1])
    one_hot = hit.astype(table_ref.dtype)                    # (Tg, P*V)

    out_ref[...] = jnp.dot(
        one_hot, table_ref[...], preferred_element_type=jnp.float32
    ).astype(out_ref.dtype)


# Conservative so the same tiling fits every generation
# (v5e scoped default 16 MiB; v6e/v7x 32 MiB scoped, v7x 64 MiB physical).
_VMEM_BUDGET_BYTES = 8 * 1024 * 1024


def char_embedding_forward(np_batch, emb_table, *, tile_tokens=4096):
    """np_batch: (B, S, W) integer indices; emb_table: (V, E) float.

    Returns (B, S, W, E), matching CharEmbeddingLayer.forward.
    """
    B, S, W = np_batch.shape
    V, E = emb_table.shape
    itemsize = jnp.dtype(emb_table.dtype).itemsize
    num_tokens = B * S * W

    # ---- output packing factor: P tokens per 128-lane output row -------------
    P = 128 // E if (E < 128 and 128 % E == 0) else 1
    if P > 1 and (P * V) * (P * E) * itemsize > _VMEM_BUDGET_BYTES // 2:
        P = 1  # packed block-diag table would not fit; fall back to unpacked output
    if V * E * itemsize > _VMEM_BUDGET_BYTES // 2:
        # TODO(synk): large-vocab path (manual DMA row gather / scalar-prefetch
        # row index_map) not implemented; char vocabularies never reach this.
        raise NotImplementedError(
            "embedding table too large for the VMEM-resident one-hot path")

    PV, PE = P * V, P * E

    # ---- token-tile sizing ----------------------------------------------------
    ALIGN = 8 * P                                   # 8 sublanes worth of packed rows
    tokens_aligned = _round_up(num_tokens, ALIGN)

    def vmem_per_step(t):
        tg = t // P
        b = 2 * tg * max(P, 128) * 4                # double-buffered idx tile (lane-padded)
        b += 2 * tg * PE * itemsize                 # double-buffered output tile
        b += 2 * PV * PE * itemsize                 # resident block-diag table
        b += 4 * tg * PV * 4                        # iota / compares / one-hot temporaries
        return b

    T = _round_up(min(tile_tokens, tokens_aligned), ALIGN)
    while T > ALIGN and vmem_per_step(T) > _VMEM_BUDGET_BYTES:
        T = max(ALIGN, _round_up(T // 2, ALIGN))
    # Guarantee >= 2 grid steps when the problem allows it, so ("parallel",)
    # actually shards across both TensorCores on v7x (neutral on v5e/v6e).
    if tokens_aligned // T < 2 and tokens_aligned >= 2 * ALIGN:
        T = _round_up((tokens_aligned + 1) // 2, ALIGN)
    padded = _round_up(num_tokens, T)
    grid = padded // T
    Tg = T // P

    # ---- operand prep (wrapper-side, plain XLA) -------------------------------
    idx_flat = jnp.clip(np_batch.reshape(num_tokens).astype(jnp.int32), 0, V - 1)
    if padded != num_tokens:
        idx_flat = jnp.pad(idx_flat, (0, padded - num_tokens))
    # off[r, p] = token_id(r*P + p) + p*V  -> row index into the block-diag table.
    off = idx_flat.reshape(padded // P, P) + (jnp.arange(P, dtype=jnp.int32) * V)[None, :]
    # Block-diagonal table (P*V, P*E): diagonal block p holds emb_table, so the
    # matmul writes token p of each group into output columns [p*E, (p+1)*E).
    big_table = (jnp.kron(jnp.eye(P, dtype=emb_table.dtype), emb_table)
                 if P > 1 else emb_table)

    grid_spec = pltpu.PrefetchScalarGridSpec(
        num_scalar_prefetch=0,
        grid=(grid,),
        in_specs=[
            pl.BlockSpec((Tg, P), lambda i: (i, 0)),     # packed token-id offsets
            pl.BlockSpec((PV, PE), lambda i: (0, 0)),    # whole table, VMEM-resident
        ],
        out_specs=pl.BlockSpec((Tg, PE), lambda i: (i, 0)),
    )

    out_packed = pl.pallas_call(
        _embed_gather_kernel,
        out_shape=jax.ShapeDtypeStruct((padded // P, PE), emb_table.dtype),
        grid_spec=grid_spec,
        compiler_params=pltpu.CompilerParams(
            dimension_semantics=("parallel",),
        ),
    )(off, big_table)

    # A (padded//P, P*E) row holds P consecutive tokens -> same flat buffer as (padded, E).
    return out_packed.reshape(padded, E)[:num_tokens].reshape(B, S, W, E)


if __name__ == "__main__":
    # Deterministic synthetic setup (no checkpoint load).
    VOCAB = 64          # num_embeddings of the nn.Embedding
    EMB_DIM = 32        # embedding_dim
    B, S, Wd = 2, 8, 8  # batch_size, seq_len, word_len

    key = jax.random.PRNGKey(0)
    k_idx, k_emb = jax.random.split(key)

    np_batch = jax.random.randint(k_idx, (B, S, Wd), 0, VOCAB, dtype=jnp.int32)
    emb_table = jax.random.normal(k_emb, (VOCAB, EMB_DIM), dtype=jnp.float32)

    out = char_embedding_forward(np_batch, emb_table)
    out = jax.block_until_ready(out)

    # Reference: plain JAX embedding lookup with the same view semantics.
    ref = jnp.take(emb_table, np_batch.reshape(B, S * Wd), axis=0).reshape(
        B, S, Wd, EMB_DIM
    )

    assert out.shape == (B, S, Wd, EMB_DIM)
    assert out.dtype == jnp.float32
    assert jnp.allclose(out, ref), "mismatch vs reference embedding lookup"

    print("KERNEL_OK")
</pallas_src>

<mosaic_0001>
module attributes {stable_mosaic.version = 11 : i64} {
  func.func @_embed_gather_kernel(%arg0: i32, %arg1: memref<16x4xi32, #tpu.memory_space<vmem>>, %arg2: memref<256x128xf32, #tpu.memory_space<vmem>>, %arg3: memref<16x128xf32, #tpu.memory_space<vmem>>) attributes {dimension_semantics = [#tpu.dimension_semantics<parallel>], iteration_bounds = array<i64: 2>, scalar_prefetch = 0 : i64, scratch_operands = 0 : i64, tpu.core_type = #tpu.core_type<tc>, window_params = [{transform_indices = @transform_0, window_bounds = array<i64: 16, 4>}, {pipeline_mode = #tpu.pipeline_mode<synchronous>, transform_indices = @transform_1, window_bounds = array<i64: 256, 128>}, {transform_indices = @transform_2, window_bounds = array<i64: 16, 128>}]} {
    %c0 = arith.constant 0 : index
    %c0_0 = arith.constant 0 : index
    %0 = vector.load %arg1[%c0, %c0_0] : memref<16x4xi32, #tpu.memory_space<vmem>>, vector<16x4xi32>
    %1 = tpu.iota {dimensions = array<i32: 1>} : vector<16x256xi32>
    %2 = vector.extract_strided_slice %0 {offsets = [0, 0], sizes = [16, 1], strides = [1, 1]} : vector<16x4xi32> to vector<16x1xi32>
    %3 = vector.broadcast %2 : vector<16x1xi32> to vector<16x256xi32>
    %4 = arith.cmpi eq, %1, %3 : vector<16x256xi32>
    %5 = vector.extract_strided_slice %0 {offsets = [0, 1], sizes = [16, 1], strides = [1, 1]} : vector<16x4xi32> to vector<16x1xi32>
    %6 = vector.broadcast %5 : vector<16x1xi32> to vector<16x256xi32>
    %7 = arith.cmpi eq, %1, %6 : vector<16x256xi32>
    %8 = arith.ori %4, %7 : vector<16x256xi1>
    %9 = vector.extract_strided_slice %0 {offsets = [0, 2], sizes = [16, 1], strides = [1, 1]} : vector<16x4xi32> to vector<16x1xi32>
    %10 = vector.broadcast %9 : vector<16x1xi32> to vector<16x256xi32>
    %11 = arith.cmpi eq, %1, %10 : vector<16x256xi32>
    %12 = arith.ori %8, %11 : vector<16x256xi1>
    %13 = vector.extract_strided_slice %0 {offsets = [0, 3], sizes = [16, 1], strides = [1, 1]} : vector<16x4xi32> to vector<16x1xi32>
    %14 = vector.broadcast %13 : vector<16x1xi32> to vector<16x256xi32>
    %15 = arith.cmpi eq, %1, %14 : vector<16x256xi32>
    %16 = arith.ori %12, %15 : vector<16x256xi1>
    %17 = arith.extui %16 : vector<16x256xi1> to vector<16x256xi32>
    %18 = arith.sitofp %17 : vector<16x256xi32> to vector<16x256xf32>
    %c0_1 = arith.constant 0 : index
    %c0_2 = arith.constant 0 : index
    %19 = vector.load %arg2[%c0_1, %c0_2] : memref<256x128xf32, #tpu.memory_space<vmem>>, vector<256x128xf32>
    %cst = arith.constant dense<0.000000e+00> : vector<16x128xf32>
    %20 = tpu.matmul %18, %19, %cst {dimension_numbers = #tpu.dot_dimension_numbers<[1], [0], [0], [1], [0, 0, 1, 1], [], []>} : vector<16x256xf32>, vector<256x128xf32>, vector<16x128xf32> -> vector<16x128xf32>
    %c0_3 = arith.constant 0 : index
    %c0_4 = arith.constant 0 : index
    %21 = vector.load %arg3[%c0_3, %c0_4] : memref<16x128xf32, #tpu.memory_space<vmem>>, vector<16x128xf32>
    tpu.vector_store %arg3[%c0_3, %c0_4], %20 {strides = array<i32>} : memref<16x128xf32, #tpu.memory_space<vmem>>, vector<16x128xf32>,
    return
  }
  func.func @transform_0(%arg0: i32) -> (i32, i32) {
    %c0_i32 = arith.constant 0 : i32
    %c0_i32_0 = arith.constant 0 : i32
    return %arg0, %c0_i32 : i32, i32
  }
  func.func @transform_1(%arg0: i32) -> (i32, i32) {
    %c0_i32 = arith.constant 0 : i32
    %c0_i32_0 = arith.constant 0 : i32
    %c0_i32_1 = arith.constant 0 : i32
    return %c0_i32, %c0_i32_0 : i32, i32
  }
  func.func @transform_2(%arg0: i32) -> (i32, i32) {
    %c0_i32 = arith.constant 0 : i32
    %c0_i32_0 = arith.constant 0 : i32
    return %arg0, %c0_i32 : i32, i32
  }
}

</mosaic_0001>

<llo_original>
// kernel: tpu_custom_call.1
$region0: #{tpu_custom_call.1}
  #allocation0 [shape = 'u32[]', space=smem, size = 0x4, offset = 0x4, fixed_abs, tag = 'smem constant byte address 0x4 - core index']
  #allocation1 [shape = 'u32[144,128]{1,0:T(1,128)}', space=vmem, size = 0x12000, scoped, tag = 'internal scratch']
  %s0 = inlined_call_operand.vmem [shape: s32[32,4], index: 0, kind: input, shape index: {}]
  %s1 = inlined_call_operand.hbm [shape: f32[256,128], index: 1, kind: input, shape index: {}]
  %s2 = inlined_call_operand.hbm [shape: f32[32,128], index: 2, kind: output, shape index: {}]
  %s3 = sld [smem:[#allocation0]]
  $region45: #{tpu_custom_call.1} parent=0
    _
  %s5 = ssub.s32 1, %s3
  %s6 = scalar_select 0, %s5, %s3
  $region1: #{tpu_custom_call.1} parent=0
    #allocation2 [shape = 'u8[131072]{0}', space=vmem, size = 0x20000, scoped, tag = 'input window, operand 1, single buffered']
    #allocation3 [shape = 's32[2]{0}', space=sflag, size = 0x8, scoped, tag = 'scoped memory for tpu_custom_call.1']
    #allocation4 [shape = 's32[2]{0}', space=sflag, size = 0x8, scoped, tag = 'scoped memory for tpu_custom_call.1']
    #allocation5 [shape = 'u8[16384]{0}', space=vmem, size = 0x4000, scoped, tag = 'output window, operand 0']
    %7 = vsyncpa [#allocation3], 0
    %8 = vsyncpa [#allocation4], 0
    %s9 = scalar_lea.sflag [#allocation4], 1
    %10 = vsyncpa %s9, 0
    loop: start=0, step=1, limit=4
    $region2: #{tpu_custom_call.1} parent=1 // loop_pre_header
      _
    $region3: #{tpu_custom_call.1} parent=1 // loop_header
      %s12 = sphi 0, %s16
      %p13 = scmp.ge.s32.totalorder %s12, 4
      %s22 = sphi 0, %s24
      %s25 = sphi 0, %s22
      %s26 = sphi 0, %s25
      %s42 = sphi 0, %s26
      %s46 = sphi 0, %s46
      %s48 = sphi 0, %s46
      %s49 = sphi 0, %s48
      %s63 = sphi 0, %s49
      %s69 = sphi 0, %s71
      %s72 = sphi 0, %s69
      %s73 = sphi 0, %s72
      %s89 = sphi 0, %s73
    $region4: #{tpu_custom_call.1} parent=1 // loop_header_branch
      %15 = sbr.rel (%p13) target = $region8
    $region5: #{tpu_custom_call.1} parent=1 // loop_body
      %s17 = ssub.s32 %s12, 1
      %s18 = ssub.s32 %s12, 2
      %s19 = sadd.s32 %s12, 1
      %s20 = ssub.s32 %s12, %s19
      %p21 = scmp.eq.s32.totalorder %s20, 0
      %s23 = sadd.s32 %s22, 1
      %s24 = scalar_select %p21, %s22, %s23
      %p27 = pneg %p21
      %p28 = scmp.eq.s32.totalorder %s12, 1
      %p29 = por %p27, %p28
      %p30 = scmp.ne.s32.totalorder %s22, %s25
      %p31 = scmp.eq.s32.totalorder %s12, 0
      %p32 = por %p30, %p31
      %p33 = scmp.ne.s32.totalorder %s22, %s25
      %p34 = scmp.eq.s32.totalorder %s17, 1
      %p35 = por %p33, %p34
      %p36 = scmp.ne.s32.totalorder %s25, %s26
      %p37 = scmp.eq.s32.totalorder %s17, 0
      %p38 = por %p36, %p37
      %p39 = scmp.ne.s32.totalorder %s25, %s26
      %p40 = scmp.eq.s32.totalorder %s18, 1
      %p41 = por %p39, %p40
      %p43 = scmp.ne.s32.totalorder %s26, %s42
      %p44 = scmp.eq.s32.totalorder %s18, 0
      %p45 = por %p43, %p44
      %s47 = sadd.s32 %s46, 1
      %p50 = scmp.eq.s32.totalorder %s12, 1
      %p51 = scmp.ne.s32.totalorder %s46, %s48
      %p52 = scmp.eq.s32.totalorder %s12, 0
      %p53 = por %p51, %p52
      %p54 = scmp.ne.s32.totalorder %s46, %s48
      %p55 = scmp.eq.s32.totalorder %s17, 1
      %p56 = por %p54, %p55
      %p57 = scmp.ne.s32.totalorder %s48, %s49
      %p58 = scmp.eq.s32.totalorder %s17, 0
      %p59 = por %p57, %p58
      %p60 = scmp.ne.s32.totalorder %s48, %s49
      %p61 = scmp.eq.s32.totalorder %s18, 1
      %p62 = por %p60, %p61
      %p64 = scmp.ne.s32.totalorder %s49, %s63
      %p65 = scmp.eq.s32.totalorder %s18, 0
      %p66 = por %p64, %p65
      %s67 = ssub.s32 %s12, %s19
      %p68 = scmp.eq.s32.totalorder %s67, 0
      %s70 = sadd.s32 %s69, 1
      %s71 = scalar_select %p68, %s69, %s70
      %p74 = pneg %p68
      %p75 = scmp.eq.s32.totalorder %s12, 1
      %p76 = por %p74, %p75
      %p77 = scmp.ne.s32.totalorder %s69, %s72
      %p78 = scmp.eq.s32.totalorder %s12, 0
      %p79 = por %p77, %p78
      %p80 = scmp.ne.s32.totalorder %s69, %s72
      %p81 = scmp.eq.s32.totalorder %s17, 1
      %p82 = por %p80, %p81
      %p83 = scmp.ne.s32.totalorder %s72, %s73
      %p84 = scmp.eq.s32.totalorder %s17, 0
      %p85 = por %p83, %p84
      %p86 = scmp.ne.s32.totalorder %s72, %s73
      %p87 = scmp.eq.s32.totalorder %s18, 1
      %p88 = por %p86, %p87
      %p90 = scmp.ne.s32.totalorder %s73, %s89
      %p91 = scmp.eq.s32.totalorder %s18, 0
      %p92 = por %p90, %p91
      %p93 = scmp.le.s32.totalorder 1, %s12
      %p94 = scmp.lt.s32.totalorder %s12, 3
      %p95 = pnand %p93, %p94
      %p96 = pneg %p95
      // Predicated region
      $region9: #{tpu_custom_call.1} parent=5 // pred_check
        _
      $region10: #{tpu_custom_call.1} parent=5 // pred_check_branch
        %98 = sbr.rel (%p95) target = $region12
      $region11: #{tpu_custom_call.1} parent=5 // pred_region
        %s99 = ssub.s32 %s12, 1
        // Predicated region
        $region13: #{tpu_custom_call.1} parent=11 // pred_check
          %p100 = pneg %p59
        $region14: #{tpu_custom_call.1} parent=11 // pred_check_branch
          %102 = sbr.rel (%p100) target = $region16
        $region15: #{tpu_custom_call.1} parent=11 // pred_region
          %s104 = ssub.s32 4096, 4096
          %105 = vsyncadd [#allocation3], %s104
          %s106 = sshll.u32 [#allocation2], 4
          %s107 = int_to_ptr.vmem [resolvable:$true] %s106
          %112 = dma.hbm_to_vmem [thread:$0]  %s1, 4096, %s107, [#allocation3], 128, 128, 8
        $region16: #{tpu_custom_call.1} parent=11 // pred_fallthru
          _
      $region12: #{tpu_custom_call.1} parent=5 // pred_fallthru
        _
      %p113 = scmp.lt.s32.totalorder %s12, 2
      // Predicated region
      $region17: #{tpu_custom_call.1} parent=5 // pred_check
        %p114 = pneg %p113
      $region18: #{tpu_custom_call.1} parent=5 // pred_check_branch
        %116 = sbr.rel (%p114) target = $region20
      $region19: #{tpu_custom_call.1} parent=5 // pred_region
        // Predicated region
        $region21: #{tpu_custom_call.1} parent=19 // pred_check
          %p117 = pneg %p32
        $region22: #{tpu_custom_call.1} parent=19 // pred_check_branch
          %119 = sbr.rel (%p117) target = $region24
        $region23: #{tpu_custom_call.1} parent=19 // pred_region
          %s120 = smul.u32 2, %s12
          %p121 = scmp.lt.s32.totalorder %s120, 3
          %s122 = scalar_select %p121, %s120, 3
          %s123 = smul.addr %s122, 8
          %s124 = scalar_lea.vmem %s0, %s123
          %s125 = smul.u32 2, %s12
        $region24: #{tpu_custom_call.1} parent=19 // pred_fallthru
          _
      $region20: #{tpu_custom_call.1} parent=5 // pred_fallthru
        _
      %p126 = scmp.le.s32.totalorder 1, %s12
      %p127 = scmp.lt.s32.totalorder %s12, 3
      %p128 = pnand %p126, %p127
      %p129 = pneg %p128
      // Predicated region
      $region25: #{tpu_custom_call.1} parent=5 // pred_check
        _
      $region26: #{tpu_custom_call.1} parent=5 // pred_check_branch
        %131 = sbr.rel (%p128) target = $region28
      $region27: #{tpu_custom_call.1} parent=5 // pred_region
        %s132 = ssub.s32 %s12, 1
        // Predicated region
        $region29: #{tpu_custom_call.1} parent=27 // pred_check
          %p133 = pneg %p59
        $region30: #{tpu_custom_call.1} parent=27 // pred_check_branch
          %135 = sbr.rel (%p133) target = $region32
        $region31: #{tpu_custom_call.1} parent=27 // pred_region
          %136 = dma.done [#allocation3], 4096
        $region32: #{tpu_custom_call.1} parent=27 // pred_fallthru
          _
        %s137 = smul.u32 2, %s17
        %p138 = scmp.lt.s32.totalorder %s137, 3
        %s139 = scalar_select %p138, %s137, 3
        %s140 = smul.addr %s139, 8
        %s141 = scalar_lea.vmem %s0, %s140
        %p142 = pneg %p38
        %p143 = pneg %p35
        %p144 = pneg %p59
        %p145 = pneg %p56
        %p146 = pneg %p85
        %p147 = pneg %p82
        %s148 = sand.u32 %s72, 1
        %s149 = scalar_lea.sflag [#allocation4], %s148
        %s150 = sand.u32 %s72, 1
        %s151 = smul.addr %s150, 16
        %s152 = scalar_lea.vmem [#allocation5], %s151
        %s153 = smul.u32 2, %s17
        %p154 = scmp.lt.s32.totalorder %s153, 3
        %s155 = scalar_select %p154, %s153, 3
        %s156 = smul.addr %s155, 8
        %s157 = scalar_lea.vmem %s0, %s156
        %s158 = smul.u32 2, %s17
        %s159 = smul.u32 2, %s17
        %v160 = vld [vmem:[%s157] sm:$0xff]
        %v161 = vld [vmem:[%s157 + $0x8] sm:$0xff]
        %v162 = vlaneseq
        %v163 = vand.u32 %v162, 127
        %v164 = vadd.s32 %v163, 128
        %165 = vset.pattern.permute.xlu0 0
        %166 = vperm.xlu0 %165, %v160
        %v167 = vpop.permute.xlu0 %166
        %168 = vset.pattern.permute.xlu0 0
        %169 = vperm.xlu0 %168, %v161
        %v170 = vpop.permute.xlu0 %169
        %vm171 = vcmp.eq.s32.totalorder %v163, %v167
        %vm172 = vcmp.eq.s32.totalorder %v164, %v167
        %vm173 = vcmp.eq.s32.totalorder %v163, %v170
        %vm174 = vcmp.eq.s32.totalorder %v164, %v170
        %175 = vset.pattern.permute.xlu0 1
        %176 = vperm.xlu0 %175, %v160
        %v177 = vpop.permute.xlu0 %176
        %178 = vset.pattern.permute.xlu0 1
        %179 = vperm.xlu0 %178, %v161
        %v180 = vpop.permute.xlu0 %179
        %vm181 = vcmp.eq.s32.totalorder %v163, %v177
        %vm182 = vcmp.eq.s32.totalorder %v164, %v177
        %vm183 = vcmp.eq.s32.totalorder %v163, %v180
        %vm184 = vcmp.eq.s32.totalorder %v164, %v180
        %vm185 = vmor %vm171, %vm181
        %vm186 = vmor %vm172, %vm182
        %vm187 = vmor %vm173, %vm183
        %vm188 = vmor %vm174, %vm184
        %189 = vset.pattern.permute.xlu0 2
        %190 = vperm.xlu0 %189, %v160
        %v191 = vpop.permute.xlu0 %190
        %192 = vset.pattern.permute.xlu0 2
        %193 = vperm.xlu0 %192, %v161
        %v194 = vpop.permute.xlu0 %193
        %vm195 = vcmp.eq.s32.totalorder %v163, %v191
        %vm196 = vcmp.eq.s32.totalorder %v164, %v191
        %vm197 = vcmp.eq.s32.totalorder %v163, %v194
        %vm198 = vcmp.eq.s32.totalorder %v164, %v194
        %vm199 = vmor %vm185, %vm195
        %vm200 = vmor %vm186, %vm196
        %vm201 = vmor %vm187, %vm197
        %vm202 = vmor %vm188, %vm198
        %203 = vset.pattern.permute.xlu0 3
        %204 = vperm.xlu0 %203, %v160
        %v205 = vpop.permute.xlu0 %204
        %206 = vset.pattern.permute.xlu0 3
        %207 = vperm.xlu0 %206, %v161
        %v208 = vpop.permute.xlu0 %207
        %vm209 = vcmp.eq.s32.totalorder %v163, %v205
        %vm210 = vcmp.eq.s32.totalorder %v164, %v205
        %vm211 = vcmp.eq.s32.totalorder %v163, %v208
        %vm212 = vcmp.eq.s32.totalorder %v164, %v208
        %vm213 = vmor %vm199, %vm209
        %vm214 = vmor %vm200, %vm210
        %vm215 = vmor %vm201, %vm211
        %vm216 = vmor %vm202, %vm212
        %v217 = vsel %vm213, 1, 0
        %v218 = vsel %vm214, 1, 0
        %v219 = vsel %vm215, 1, 0
        %v220 = vsel %vm216, 1, 0
        %v221 = vcvt.s32.f32 %v217
        %v222 = vcvt.s32.f32 %v218
        %v223 = vcvt.s32.f32 %v219
        %v224 = vcvt.s32.f32 %v220
        %v225 = vld [vmem:[#allocation2] sm:$0xff]
        %v226 = vld [vmem:[#allocation2 + $0x8] sm:$0xff]
        %v227 = vld [vmem:[#allocation2 + $0x10] sm:$0xff]
        %v228 = vld [vmem:[#allocation2 + $0x18] sm:$0xff]
        %v229 = vld [vmem:[#allocation2 + $0x20] sm:$0xff]
        %v230 = vld [vmem:[#allocation2 + $0x28] sm:$0xff]
        %v231 = vld [vmem:[#allocation2 + $0x30] sm:$0xff]
        %v232 = vld [vmem:[#allocation2 + $0x38] sm:$0xff]
        %v233 = vld [vmem:[#allocation2 + $0x40] sm:$0xff]
        %v234 = vld [vmem:[#allocation2 + $0x48] sm:$0xff]
        %v235 = vld [vmem:[#allocation2 + $0x50] sm:$0xff]
        %v236 = vld [vmem:[#allocation2 + $0x58] sm:$0xff]
        %v237 = vld [vmem:[#allocation2 + $0x60] sm:$0xff]
        %v238 = vld [vmem:[#allocation2 + $0x68] sm:$0xff]
        %v239 = vld [vmem:[#allocation2 + $0x70] sm:$0xff]
        %v240 = vld [vmem:[#allocation2 + $0x78] sm:$0xff]
        %v241 = vld [vmem:[#allocation2 + $0x80] sm:$0xff]
        %v242 = vld [vmem:[#allocation2 + $0x88] sm:$0xff]
        %v243 = vld [vmem:[#allocation2 + $0x90] sm:$0xff]
        %v244 = vld [vmem:[#allocation2 + $0x98] sm:$0xff]
        %v245 = vld [vmem:[#allocation2 + $0xa0] sm:$0xff]
        %v246 = vld [vmem:[#allocation2 + $0xa8] sm:$0xff]
        %v247 = vld [vmem:[#allocation2 + $0xb0] sm:$0xff]
        %v248 = vld [vmem:[#allocation2 + $0xb8] sm:$0xff]
        %v249 = vld [vmem:[#allocation2 + $0xc0] sm:$0xff]
        %v250 = vld [vmem:[#allocation2 + $0xc8] sm:$0xff]
        %v251 = vld [vmem:[#allocation2 + $0xd0] sm:$0xff]
        %v252 = vld [vmem:[#allocation2 + $0xd8] sm:$0xff]
        %v253 = vld [vmem:[#allocation2 + $0xe0] sm:$0xff]
        %v254 = vld [vmem:[#allocation2 + $0xe8] sm:$0xff]
        %v255 = vld [vmem:[#allocation2 + $0xf0] sm:$0xff]
        %v256 = vld [vmem:[#allocation2 + $0xf8] sm:$0xff]
        %257 = vmatprep.subr.mxu0 0.0
        %258 = vmatpush1.msra.mxu0 %v240
        %259 = vmatprep.subr.mxu0 0.0
        %260 = vmatpush1.msra.mxu0 %v239
        %261 = vmatprep.subr.mxu0 0.0
        %262 = vmatpush1.msra.mxu0 %v238
        %263 = vmatprep.subr.mxu0 0.0
        %264 = vmatpush1.msra.mxu0 %v237
        %265 = vmatprep.subr.mxu0 0.0
        %266 = vmatpush1.msra.mxu0 %v236
        %267 = vmatprep.subr.mxu0 0.0
        %268 = vmatpush1.msra.mxu0 %v235
        %269 = vmatprep.subr.mxu0 0.0
        %270 = vmatpush1.msra.mxu0 %v234
        %271 = vmatprep.subr.mxu0 0.0
        %272 = vmatpush1.msra.mxu0 %v233
        %273 = vmatprep.subr.mxu0 0.0
        %274 = vmatpush1.msra.mxu0 %v232
        %275 = vmatprep.subr.mxu0 0.0
        %276 = vmatpush1.msra.mxu0 %v231
        %277 = vmatprep.subr.mxu0 0.0
        %278 = vmatpush1.msra.mxu0 %v230
        %279 = vmatprep.subr.mxu0 0.0
        %280 = vmatpush1.msra.mxu0 %v229
        %281 = vmatprep.subr.mxu0 0.0
        %282 = vmatpush1.msra.mxu0 %v228
        %283 = vmatprep.subr.mxu0 0.0
        %284 = vmatpush1.msra.mxu0 %v227
        %285 = vmatprep.subr.mxu0 0.0
        %286 = vmatpush1.msra.mxu0 %v226
        %287 = vmatprep.subr.mxu0 0.0
        %288 = vmatpush1.msra.mxu0 %v225
        %289 = vmatprep.subr.mxu0 0.0
        %290 = vmatpush2.msra.mxu0 %v256
        %291 = vmatprep.subr.mxu0 0.0
        %292 = vmatpush2.msra.mxu0 %v255
        %293 = vmatprep.subr.mxu0 0.0
        %294 = vmatpush2.msra.mxu0 %v254
        %295 = vmatprep.subr.mxu0 0.0
        %296 = vmatpush2.msra.mxu0 %v253
        %297 = vmatprep.subr.mxu0 0.0
        %298 = vmatpush2.msra.mxu0 %v252
        %299 = vmatprep.subr.mxu0 0.0
        %300 = vmatpush2.msra.mxu0 %v251
        %301 = vmatprep.subr.mxu0 0.0
        %302 = vmatpush2.msra.mxu0 %v250
        %303 = vmatprep.subr.mxu0 0.0
        %304 = vmatpush2.msra.mxu0 %v249
        %305 = vmatprep.subr.mxu0 0.0
        %306 = vmatpush2.msra.mxu0 %v248
        %307 = vmatprep.subr.mxu0 0.0
        %308 = vmatpush2.msra.mxu0 %v247
        %309 = vmatprep.subr.mxu0 0.0
        %310 = vmatpush2.msra.mxu0 %v246
        %311 = vmatprep.subr.mxu0 0.0
        %312 = vmatpush2.msra.mxu0 %v245
        %313 = vmatprep.subr.mxu0 0.0
        %314 = vmatpush2.msra.mxu0 %v244
        %315 = vmatprep.subr.mxu0 0.0
        %316 = vmatpush2.msra.mxu0 %v243
        %317 = vmatprep.subr.mxu0 0.0
        %318 = vmatpush2.msra.mxu0 %v242
        %319 = vmatprep.subr.mxu0 0.0
        %320 = vmatpush2.msra.mxu0 %v241
        %321 = vmatprep.mubr.f32.mxu0 %v222
        %322 = vmatmul.mubr.f32.gmra.mxu0 %v221
        %v323 = vpop.f32.mrf.mxu0
        %v324 = vadd.f32 0.0, %v323
        %v325 = vpop.f32.mrf.mxu0
        %326 = vmatprep.mubr.f32.mxu0 %v224
        %327 = vmatmul.mubr.f32.gmra.mxu0 %v223
        %v328 = vpop.f32.mrf.mxu0
        %v329 = vadd.f32 0.0, %v328
        %v330 = vpop.f32.mrf.mxu0
        %331 = vdwg.mxu0
        %332 = vst [vmem:[%s152] sm:$0xff] %v324
        %333 = vst [vmem:[%s152 + $0x8] sm:$0xff] %v329
        %s334 = sand.u32 %s72, 1
        %s335 = scalar_lea.sflag [#allocation4], %s334
        %s336 = sand.u32 %s72, 1
        %s337 = smul.addr %s336, 16
        %s338 = scalar_lea.vmem [#allocation5], %s337
        // Predicated region
        $region33: #{tpu_custom_call.1} parent=27 // pred_check
          %p339 = pneg %p82
        $region34: #{tpu_custom_call.1} parent=27 // pred_check_branch
          %341 = sbr.rel (%p339) target = $region36
        $region35: #{tpu_custom_call.1} parent=27 // pred_region
          %s342 = smul.u32 2, %s17
          %s344 = ssub.s32 256, 256
          %345 = vsyncadd %s335, %s344
          %s346 = smul.addr %s342, 128
          %s347 = scalar_lea.hbm %s2, %s346
          %s348 = sshll.u32 %s338, 4
          %s349 = int_to_ptr.vmem [resolvable:$true] %s348
          %354 = dma.vmem_to_hbm [thread:$0]  %s349, 256, %s347, %s335, 128, 128, 8
        $region36: #{tpu_custom_call.1} parent=27 // pred_fallthru
          _
      $region28: #{tpu_custom_call.1} parent=5 // pred_fallthru
        _
      %p355 = scmp.le.s32.totalorder 2, %s12
      // Predicated region
      $region37: #{tpu_custom_call.1} parent=5 // pred_check
        %p356 = pneg %p355
      $region38: #{tpu_custom_call.1} parent=5 // pred_check_branch
        %358 = sbr.rel (%p356) target = $region40
      $region39: #{tpu_custom_call.1} parent=5 // pred_region
        %s359 = ssub.s32 %s12, 2
        // Predicated region
        $region41: #{tpu_custom_call.1} parent=39 // pred_check
          %p360 = pneg %p88
        $region42: #{tpu_custom_call.1} parent=39 // pred_check_branch
          %362 = sbr.rel (%p360) target = $region44
        $region43: #{tpu_custom_call.1} parent=39 // pred_region
          %s363 = sand.u32 %s73, 1
          %s364 = scalar_lea.sflag [#allocation4], %s363
          %s365 = sand.u32 %s73, 1
          %s366 = smul.addr %s365, 16
          %s367 = scalar_lea.vmem [#allocation5], %s366
          %368 = dma.done %s364, 256
        $region44: #{tpu_custom_call.1} parent=39 // pred_fallthru
          _
      $region40: #{tpu_custom_call.1} parent=5 // pred_fallthru
        _
    $region6: #{tpu_custom_call.1} parent=1 // loop_footer
      %s16 = sadd.s32 1, %s12
    $region7: #{tpu_custom_call.1} parent=1 // loop_footer_branch
      %11 = sbr.rel target = $region3
    $region8: #{tpu_custom_call.1} parent=1 // loop_exit
      _
    %369 = vsyncpa [#allocation3], 1
    %s370 = scalar_lea.sflag [#allocation3], 1
    %371 = vsyncpa %s370, 1
    %372 = vsyncpa [#allocation4], 1
    %s373 = scalar_lea.sflag [#allocation4], 1
    %374 = vsyncpa %s373, 1

</llo_original>
